<compile_context>
chip_gen: v7x
topology: tpu7x:2x2x1
jax: 0.10.0
libtpu: 0.0.40
codegen_flags: <defaults>
</compile_context>

<pallas_src>
import jax
import jax.numpy as jnp
from jax import lax
from jax.experimental import pallas as pl
from jax.experimental.pallas import tpu as pltpu


def _make_mse_kernel(R, T, rb, steps_per_split, need_mask):
    """Accumulate per-(sublane, lane) partial sums of (a-b)^2 into o_ref."""

    def kernel(a_ref, b_ref, o_ref):
        split = pl.program_id(0)   # "parallel" axis (one half per TensorCore on v7x)
        step = pl.program_id(1)    # "arbitrary" (sequential reduction) axis

        # Zero this split's accumulator at its first reduction step.
        @pl.when(step == 0)
        def _():
            o_ref[...] = jnp.zeros_like(o_ref)

        d = a_ref[...].astype(jnp.float32) - b_ref[...].astype(jnp.float32)

        if need_mask:
            # Mask rows past R: covers the R % rb tail and fully-out-of-range
            # overhang steps (whose index_map was clamped to the last real block).
            blk = split * steps_per_split + step
            row_ids = blk * rb + lax.broadcasted_iota(jnp.int32, (rb, T), 0)
            d = jnp.where(row_ids < R, d, 0.0)

        d2 = d * d

        # Tree-reduce sublane groups (rb, T) -> (8, T): rb is 8 * 2**k, so every
        # slice is sublane-tile aligned and this is pure VPU work (no XLU).
        rows = rb
        while rows > 8:
            rows //= 2
            d2 = d2[:rows, :] + d2[rows:, :]

        o_ref[...] += d2

    return kernel


def mse_loss_pallas(mel_out: jax.Array, mel_target: jax.Array,
                    *, target_block_bytes: int = 2 * 1024 * 1024) -> jax.Array:
    """Equivalent of torch.nn.MSELoss()(mel_out, mel_target) (reduction='mean')."""
    assert mel_out.shape == mel_target.shape, "MSELoss here assumes matching shapes"

    if mel_out.ndim == 0:
        d = mel_out.astype(jnp.float32) - mel_target.astype(jnp.float32)
        return (d * d).astype(jnp.float32)

    n_total = mel_out.size
    T = mel_out.shape[-1]
    R = n_total // T

    # Free (no-copy) 2-D view: collapse all leading dims; last dim stays lane-dense.
    a2 = mel_out.reshape(R, T)
    b2 = mel_target.reshape(R, T)

    SUB = 8
    if R >= SUB:
        # rows per block: 8 * 2**k, sized so one f32 block is ~target_block_bytes,
        # never exceeding R (the partial tail block is masked in-kernel).
        rb_cap = min(max(target_block_bytes // (T * 4), SUB), R)
        rb = SUB << ((rb_cap // SUB).bit_length() - 1)
        acc_rows = SUB
    else:
        rb = R                  # tiny input: single block equal to the full dims
        acc_rows = R
    # TODO(synk): pathologically long last dims (8*T*4 > VMEM budget) would also
    # need lane tiling; not needed for mel-spectrogram shapes.

    num_blocks = pl.cdiv(R, rb)
    # Two independent partial sums -> v7x's 2 TensorCores can each take one half.
    nsplit = 2 if num_blocks >= 2 else 1
    steps_per_split = pl.cdiv(num_blocks, nsplit)
    need_mask = (nsplit * steps_per_split * rb) != R

    def in_map(s, i):
        # Clamp overhang steps to the last real block; their rows get masked out.
        return (jnp.minimum(s * steps_per_split + i, num_blocks - 1), 0)

    kernel = _make_mse_kernel(R, T, rb, steps_per_split, need_mask)

    grid_spec = pltpu.PrefetchScalarGridSpec(
        num_scalar_prefetch=0,
        grid=(nsplit, steps_per_split),
        in_specs=[
            pl.BlockSpec((rb, T), in_map),
            pl.BlockSpec((rb, T), in_map),
        ],
        out_specs=pl.BlockSpec((acc_rows, T), lambda s, i: (s, 0)),
    )

    itemsize = jnp.dtype(mel_out.dtype).itemsize
    cost = pl.CostEstimate(
        flops=3 * n_total,
        transcendentals=0,
        bytes_accessed=2 * n_total * itemsize + nsplit * acc_rows * T * 4,
    )

    partials = pl.pallas_call(
        kernel,
        out_shape=jax.ShapeDtypeStruct((nsplit * acc_rows, T), jnp.float32),
        grid_spec=grid_spec,
        compiler_params=pltpu.CompilerParams(
            dimension_semantics=("parallel", "arbitrary"),
            vmem_limit_bytes=32 * 1024 * 1024,
        ),
        cost_estimate=cost,
    )(a2, b2)

    # Single final cross-lane reduction on a tiny array, then the mean over the
    # ORIGINAL element count (matches PyTorch MSELoss reduction='mean').
    return (jnp.sum(partials) / jnp.float32(n_total)).astype(jnp.float32)


if __name__ == "__main__":
    key = jax.random.PRNGKey(0)

    test_cases = [
        # (shape, kwargs)
        ((2, 8, 50), {}),                              # mel-like (B, n_mels, T), single block
        ((3, 5, 37), {}),                              # row-tail masking + 2 parallel splits
        ((6, 8, 64), dict(target_block_bytes=2048)),   # multi-step accumulation per split
        ((5, 8, 64), dict(target_block_bytes=2048)),   # grid overhang (clamped + masked step)
    ]

    for shape, kw in test_cases:
        key, k1, k2 = jax.random.split(key, 3)
        mel_out = jax.random.normal(k1, shape, dtype=jnp.float32)
        mel_target = jax.random.normal(k2, shape, dtype=jnp.float32)

        loss = mse_loss_pallas(mel_out, mel_target, **kw)
        jax.block_until_ready(loss)

        ref = jnp.mean((mel_out - mel_target) ** 2)
        assert jnp.allclose(loss, ref, rtol=1e-5, atol=1e-6), (shape, loss, ref)

    print("KERNEL_OK")
</pallas_src>

<mosaic_0001>
module attributes {stable_mosaic.version = 11 : i64} {
  func.func @kernel(%arg0: i32, %arg1: i32, %arg2: memref<16x50xf32, #tpu.memory_space<vmem>>, %arg3: memref<16x50xf32, #tpu.memory_space<vmem>>, %arg4: memref<8x50xf32, #tpu.memory_space<vmem>>) attributes {dimension_semantics = [#tpu.dimension_semantics<parallel>, #tpu.dimension_semantics<arbitrary>], iteration_bounds = array<i64: 1, 1>, scalar_prefetch = 0 : i64, scratch_operands = 0 : i64, tpu.core_type = #tpu.core_type<tc>, window_params = [{transform_indices = @transform_0, window_bounds = array<i64: 16, 50>}, {transform_indices = @transform_1, window_bounds = array<i64: 16, 50>}, {transform_indices = @transform_2, window_bounds = array<i64: 8, 50>}]} {
    %c0_i32 = arith.constant 0 : i32
    %0 = arith.cmpi eq, %arg1, %c0_i32 : i32
    %1 = arith.extui %0 : i1 to i32
    %c0_i32_0 = arith.constant 0 : i32
    %2 = arith.cmpi ne, %1, %c0_i32_0 : i32
    scf.if %2 {
      %cst = arith.constant 0.000000e+00 : f32
      %13 = vector.broadcast %cst : f32 to vector<8x50xf32>
      %c0_8 = arith.constant 0 : index
      %c0_9 = arith.constant 0 : index
      %14 = vector.load %arg4[%c0_8, %c0_9] : memref<8x50xf32, #tpu.memory_space<vmem>>, vector<8x50xf32>
      tpu.vector_store %arg4[%c0_8, %c0_9], %13 {strides = array<i32>} : memref<8x50xf32, #tpu.memory_space<vmem>>, vector<8x50xf32>,
    } else {
    }
    %c0 = arith.constant 0 : index
    %c0_1 = arith.constant 0 : index
    %3 = vector.load %arg2[%c0, %c0_1] : memref<16x50xf32, #tpu.memory_space<vmem>>, vector<16x50xf32>
    %c0_2 = arith.constant 0 : index
    %c0_3 = arith.constant 0 : index
    %4 = vector.load %arg3[%c0_2, %c0_3] : memref<16x50xf32, #tpu.memory_space<vmem>>, vector<16x50xf32>
    %5 = arith.subf %3, %4 : vector<16x50xf32>
    %6 = arith.mulf %5, %5 : vector<16x50xf32>
    %7 = vector.extract_strided_slice %6 {offsets = [0, 0], sizes = [8, 50], strides = [1, 1]} : vector<16x50xf32> to vector<8x50xf32>
    %8 = vector.extract_strided_slice %6 {offsets = [8, 0], sizes = [8, 50], strides = [1, 1]} : vector<16x50xf32> to vector<8x50xf32>
    %9 = arith.addf %7, %8 : vector<8x50xf32>
    %c0_4 = arith.constant 0 : index
    %c0_5 = arith.constant 0 : index
    %10 = vector.load %arg4[%c0_4, %c0_5] : memref<8x50xf32, #tpu.memory_space<vmem>>, vector<8x50xf32>
    %11 = arith.addf %10, %9 : vector<8x50xf32>
    %c0_6 = arith.constant 0 : index
    %c0_7 = arith.constant 0 : index
    %12 = vector.load %arg4[%c0_6, %c0_7] : memref<8x50xf32, #tpu.memory_space<vmem>>, vector<8x50xf32>
    tpu.vector_store %arg4[%c0_6, %c0_7], %11 {strides = array<i32>} : memref<8x50xf32, #tpu.memory_space<vmem>>, vector<8x50xf32>,
    return
  }
  func.func @transform_0(%arg0: i32, %arg1: i32) -> (i32, i32) {
    %c1_i32 = arith.constant 1 : i32
    %0 = arith.muli %arg0, %c1_i32 : i32
    %1 = arith.addi %0, %arg1 : i32
    %c0_i32 = arith.constant 0 : i32
    %2 = arith.minsi %1, %c0_i32 : i32
    %c0_i32_0 = arith.constant 0 : i32
    %c0_i32_1 = arith.constant 0 : i32
    return %2, %c0_i32_0 : i32, i32
  }
  func.func @transform_1(%arg0: i32, %arg1: i32) -> (i32, i32) {
    %c1_i32 = arith.constant 1 : i32
    %0 = arith.muli %arg0, %c1_i32 : i32
    %1 = arith.addi %0, %arg1 : i32
    %c0_i32 = arith.constant 0 : i32
    %2 = arith.minsi %1, %c0_i32 : i32
    %c0_i32_0 = arith.constant 0 : i32
    %c0_i32_1 = arith.constant 0 : i32
    return %2, %c0_i32_0 : i32, i32
  }
  func.func @transform_2(%arg0: i32, %arg1: i32) -> (i32, i32) {
    %c0_i32 = arith.constant 0 : i32
    %c0_i32_0 = arith.constant 0 : i32
    return %arg0, %c0_i32 : i32, i32
  }
}

</mosaic_0001>

<llo_original>
// kernel: tpu_custom_call.1
$region0: #{tpu_custom_call.1}
  #allocation0 [shape = 'u32[]', space=smem, size = 0x4, offset = 0x4, fixed_abs, tag = 'smem constant byte address 0x4 - core index']
  #allocation1 [shape = 'u32[144,128]{1,0:T(1,128)}', space=vmem, size = 0x12000, scoped, tag = 'internal scratch']
  %s0 = inlined_call_operand.hbm [shape: f32[16,50], index: 0, kind: input, shape index: {}]
  %s1 = inlined_call_operand.hbm [shape: f32[16,50], index: 1, kind: input, shape index: {}]
  %s2 = inlined_call_operand.hbm [shape: f32[8,50], index: 2, kind: output, shape index: {}]
  %s3 = sld [smem:[#allocation0]]
  $region30: #{tpu_custom_call.1} parent=0
    _
  %s5 = ssub.s32 1, %s3
  %s6 = scalar_select 0, %s5, %s3
  $region1: #{tpu_custom_call.1} parent=0
    #allocation2 [shape = 'u8[8192]{0}', space=vmem, size = 0x2000, scoped, tag = 'input window, operand 0, single buffered']
    #allocation3 [shape = 's32[1]{0}', space=sflag, size = 0x4, scoped, tag = 'scoped memory for tpu_custom_call.1']
    #allocation4 [shape = 's32[1]{0}', space=sflag, size = 0x4, scoped, tag = 'scoped memory for tpu_custom_call.1']
    #allocation5 [shape = 'u8[8192]{0}', space=vmem, size = 0x2000, scoped, tag = 'input window, operand 1, single buffered']
    #allocation6 [shape = 's32[1]{0}', space=sflag, size = 0x4, scoped, tag = 'scoped memory for tpu_custom_call.1']
    #allocation7 [shape = 'u8[4096]{0}', space=vmem, size = 0x1000, scoped, tag = 'output window, operand 0, single buffered']
    %7 = vsyncpa [#allocation3], 0
    %8 = vsyncpa [#allocation6], 0
    %9 = vsyncpa [#allocation4], 0
    // Predicated region
    $region2: #{tpu_custom_call.1} parent=1 // pred_check
      _
    $region3: #{tpu_custom_call.1} parent=1 // pred_check_branch
      %11 = sbr.rel (0) target = $region5
    $region4: #{tpu_custom_call.1} parent=1 // pred_region
      %s12 = sadd.s32 0, 0
      %p13 = scmp.lt.s32.totalorder %s12, 0
      %s14 = scalar_select %p13, %s12, 0
      %s15 = smul.u32 2, %s14
      %s17 = ssub.s32 256, 256
      %18 = vsyncadd [#allocation3], %s17
      %s19 = smul.addr %s15, 128
      %s20 = scalar_lea.hbm %s0, %s19
      %s21 = sshll.u32 [#allocation2], 4
      %s22 = int_to_ptr.vmem [resolvable:$true] %s21
      %27 = dma.hbm_to_vmem [thread:$0]  %s20, 256, %s22, [#allocation3], 128, 128, 8
    $region5: #{tpu_custom_call.1} parent=1 // pred_fallthru
      _
    // Predicated region
    $region6: #{tpu_custom_call.1} parent=1 // pred_check
      _
    $region7: #{tpu_custom_call.1} parent=1 // pred_check_branch
      %29 = sbr.rel (0) target = $region9
    $region8: #{tpu_custom_call.1} parent=1 // pred_region
      %s30 = sadd.s32 0, 0
      %p31 = scmp.lt.s32.totalorder %s30, 0
      %s32 = scalar_select %p31, %s30, 0
      %s33 = smul.u32 2, %s32
      %s35 = ssub.s32 256, 256
      %36 = vsyncadd [#allocation6], %s35
      %s37 = smul.addr %s33, 128
      %s38 = scalar_lea.hbm %s1, %s37
      %s39 = sshll.u32 [#allocation5], 4
      %s40 = int_to_ptr.vmem [resolvable:$true] %s39
      %45 = dma.hbm_to_vmem [thread:$0]  %s38, 256, %s40, [#allocation6], 128, 128, 8
    $region9: #{tpu_custom_call.1} parent=1 // pred_fallthru
      _
    // Predicated region
    $region10: #{tpu_custom_call.1} parent=1 // pred_check
      _
    $region11: #{tpu_custom_call.1} parent=1 // pred_check_branch
      %47 = sbr.rel (0) target = $region13
    $region12: #{tpu_custom_call.1} parent=1 // pred_region
      %48 = dma.done [#allocation3], 256
    $region13: #{tpu_custom_call.1} parent=1 // pred_fallthru
      _
    // Predicated region
    $region14: #{tpu_custom_call.1} parent=1 // pred_check
      _
    $region15: #{tpu_custom_call.1} parent=1 // pred_check_branch
      %50 = sbr.rel (0) target = $region17
    $region16: #{tpu_custom_call.1} parent=1 // pred_region
      %51 = dma.done [#allocation6], 256
    $region17: #{tpu_custom_call.1} parent=1 // pred_fallthru
      _
    %s52 = sadd.s32 0, 0
    %p53 = scmp.lt.s32.totalorder %s52, 0
    %s54 = scalar_select %p53, %s52, 0
    %s55 = smul.u32 2, %s54
    %s56 = sadd.s32 0, 0
    %p57 = scmp.lt.s32.totalorder %s56, 0
    %s58 = scalar_select %p57, %s56, 0
    %s59 = smul.u32 2, %s58
    %p60 = scmp.eq.s32.totalorder 0, 0
    // Predicated region
    $region18: #{tpu_custom_call.1} parent=1 // pred_check
      %p61 = pneg %p60
    $region19: #{tpu_custom_call.1} parent=1 // pred_check_branch
      %63 = sbr.rel (%p61) target = $region21
    $region20: #{tpu_custom_call.1} parent=1 // pred_region
      %vm64 = vcmask 408576
      %65 = vst.msk [vmem:[#allocation7] sm:$0xff] %vm64, 0.0
    $region21: #{tpu_custom_call.1} parent=1 // pred_fallthru
      _
    %v66 = vld [vmem:[#allocation2] sm:$0xff]
    %v67 = vld [vmem:[#allocation2 + $0x8] sm:$0xff]
    %v68 = vld [vmem:[#allocation5] sm:$0xff]
    %v69 = vld [vmem:[#allocation5 + $0x8] sm:$0xff]
    %v70 = vsub.f32 %v66, %v68
    %v71 = vsub.f32 %v67, %v69
    %v72 = vmul.f32 %v70, %v70
    %v73 = vmul.f32 %v71, %v71
    %v74 = vadd.f32 %v72, %v73
    %v75 = vld [vmem:[#allocation7] sm:$0xff]
    %v76 = vadd.f32 %v75, %v74
    %vm77 = vcmask 408576
    %78 = vst.msk [vmem:[#allocation7] sm:$0xff] %vm77, %v76
    // Predicated region
    $region22: #{tpu_custom_call.1} parent=1 // pred_check
      _
    $region23: #{tpu_custom_call.1} parent=1 // pred_check_branch
      %80 = sbr.rel (0) target = $region25
    $region24: #{tpu_custom_call.1} parent=1 // pred_region
      %s82 = ssub.s32 128, 128
      %83 = vsyncadd [#allocation4], %s82
      %s85 = sshll.u32 [#allocation7], 4
      %s86 = int_to_ptr.vmem [resolvable:$true] %s85
      %88 = dma.vmem_to_hbm [thread:$0]  %s86, 128, %s2, [#allocation4]
    $region25: #{tpu_custom_call.1} parent=1 // pred_fallthru
      _
    // Predicated region
    $region26: #{tpu_custom_call.1} parent=1 // pred_check
      _
    $region27: #{tpu_custom_call.1} parent=1 // pred_check_branch
      %90 = sbr.rel (0) target = $region29
    $region28: #{tpu_custom_call.1} parent=1 // pred_region
      %91 = dma.done [#allocation4], 128
    $region29: #{tpu_custom_call.1} parent=1 // pred_fallthru
      _
    %92 = vsyncpa [#allocation3], 1
    %93 = vsyncpa [#allocation6], 1
    %94 = vsyncpa [#allocation4], 1

</llo_original>
